<compile_context>
chip_gen: v7x
topology: tpu7x:2x2x1
jax: 0.10.0
libtpu: 0.0.40
codegen_flags: <defaults>
</compile_context>

<pallas_src>
import functools
import math

import jax
import jax.numpy as jnp
from jax.experimental import pallas as pl
from jax.experimental.pallas import tpu as pltpu

_EPS = 1e-09
_BLOCK_ELEMS = 512 * 1024            # elems per input block: 2 MiB f32 / 1 MiB bf16
_VMEM_LIMIT = 32 * 1024 * 1024       # safe on v5e/v6e (128 MiB) and v7x (64 MiB)


def _round_up(x, m):
    return (x + m - 1) // m * m


def _choose_layout(n):
    """Pick lane width W so reshape(n) -> (rows, W) is a free bitcast with
    rows % 8 == 0.  Falls back to a small zero-pad for awkward sizes."""
    for w in (512, 256, 128):
        if n % (8 * w) == 0:
            return w, n // w, 0
    n_pad = _round_up(n, 8 * 128)
    return 128, n_pad // 128, n_pad - n


def _rmse_elementwise_kernel(p_ref, t_ref, o_ref, *, eps):
    """reduction='none': sqrt((p - t)^2 + eps) per element, cast on store."""
    d = p_ref[...].astype(jnp.float32) - t_ref[...].astype(jnp.float32)
    o_ref[...] = jnp.sqrt(d * d + eps).astype(o_ref.dtype)


def _rmse_reduce_kernel(p_ref, t_ref, out_ref, acc_ref, *,
                        eps, rows, row_tile, steps, mask_last):
    """Accumulates sum(sqrt((p - t)^2 + eps)) into an (8, W) VPU accumulator;
    writes a (1, W) per-split partial sum on the last step.  Masking runs
    only on the single final partial block (if any)."""
    c = pl.program_id(0)          # parallel split (v7x megacore)
    k = pl.program_id(1)          # sequential reduction steps

    @pl.when(k == 0)
    def _():
        acc_ref[...] = jnp.zeros_like(acc_ref)

    d = p_ref[...].astype(jnp.float32) - t_ref[...].astype(jnp.float32)
    loss = jnp.sqrt(d * d + eps)
    lanes = loss.shape[-1]

    if mask_last:
        blk = c * steps + k
        is_partial = (blk + 1) * row_tile > rows

        @pl.when(jnp.logical_not(is_partial))
        def _():
            acc_ref[...] += loss.reshape(-1, 8, lanes).sum(axis=0)

        @pl.when(is_partial)
        def _():
            row0 = blk * row_tile
            row_ids = jax.lax.broadcasted_iota(jnp.int32, loss.shape, 0)
            masked = jnp.where(row0 + row_ids < rows, loss, 0.0)
            acc_ref[...] += masked.reshape(-1, 8, lanes).sum(axis=0)
    else:
        acc_ref[...] += loss.reshape(-1, 8, lanes).sum(axis=0)

    @pl.when(k == pl.num_programs(1) - 1)
    def _():
        out_ref[...] = jnp.sum(acc_ref[...], axis=0, keepdims=True)


def rmse_loss(y_pred, y_true, *, reduction="mean", eps=_EPS):
    assert y_pred.shape == y_true.shape, "shapes must match (MSELoss semantics)"
    orig_shape = y_pred.shape
    out_dtype = jnp.result_type(y_pred.dtype, y_true.dtype)
    n = int(math.prod(orig_shape))

    if n == 0:                                  # PyTorch edge cases
        if reduction == "none":
            return jnp.zeros(orig_shape, out_dtype)
        if reduction == "sum":
            return jnp.array(0.0, out_dtype)
        return jnp.array(jnp.nan, out_dtype)    # mean of empty -> nan

    w, rows, pad = _choose_layout(n)
    p_flat = y_pred.reshape(-1)
    t_flat = y_true.reshape(-1)
    if pad:                                     # rare fallback only
        p_flat = jnp.pad(p_flat, (0, pad))
        t_flat = jnp.pad(t_flat, (0, pad))
    p2d = p_flat.reshape(rows, w)               # free bitcast when pad == 0
    t2d = t_flat.reshape(rows, w)

    row_tile = min(_BLOCK_ELEMS // w, rows)     # both multiples of 8
    num_blocks = -(-rows // row_tile)
    mask_last = (rows % row_tile) != 0          # only the final block is partial

    if reduction == "none":
        out2d = pl.pallas_call(
            functools.partial(_rmse_elementwise_kernel, eps=eps),
            out_shape=jax.ShapeDtypeStruct((rows, w), out_dtype),
            grid_spec=pltpu.PrefetchScalarGridSpec(
                num_scalar_prefetch=0,
                grid=(num_blocks,),
                in_specs=[pl.BlockSpec((row_tile, w), lambda i: (i, 0)),
                          pl.BlockSpec((row_tile, w), lambda i: (i, 0))],
                out_specs=pl.BlockSpec((row_tile, w), lambda i: (i, 0)),
            ),
            compiler_params=pltpu.CompilerParams(
                dimension_semantics=("parallel",),
                vmem_limit_bytes=_VMEM_LIMIT),
        )(p2d, t2d)
        flat = out2d.reshape(-1)
        if pad:
            flat = flat[:n]
        return flat.reshape(orig_shape)

    # 'mean' / 'sum' reduction path.
    # 2-way split (v7x megacore) only when it needs no extra padding.
    num_splits = 2 if (num_blocks >= 2 and num_blocks % 2 == 0) else 1
    steps = num_blocks // num_splits

    in_map = lambda c, k: (c * steps + k, 0)
    partials = pl.pallas_call(
        functools.partial(_rmse_reduce_kernel, eps=eps, rows=rows,
                          row_tile=row_tile, steps=steps, mask_last=mask_last),
        out_shape=jax.ShapeDtypeStruct((num_splits, w), jnp.float32),
        grid_spec=pltpu.PrefetchScalarGridSpec(
            num_scalar_prefetch=0,
            grid=(num_splits, steps),
            in_specs=[pl.BlockSpec((row_tile, w), in_map),
                      pl.BlockSpec((row_tile, w), in_map)],
            out_specs=pl.BlockSpec((1, w), lambda c, k: (c, 0)),
            scratch_shapes=[pltpu.VMEM((8, w), jnp.float32)],
        ),
        compiler_params=pltpu.CompilerParams(
            dimension_semantics=("parallel", "arbitrary"),
            vmem_limit_bytes=_VMEM_LIMIT),
    )(p2d, t2d)

    total = jnp.sum(partials)                   # tiny (num_splits, W) reduce
    if pad:
        # zero-padded elements each contribute exactly sqrt(eps): correct analytically
        total = total - jnp.float32(pad) * jnp.sqrt(jnp.float32(eps))
    if reduction == "sum":
        return total.astype(out_dtype)
    return (total / jnp.float32(n)).astype(out_dtype)   # default: 'mean'


if __name__ == "__main__":
    key = jax.random.PRNGKey(0)
    k1, k2, k3, k4 = jax.random.split(key, 4)

    # Small NCHW-like tensors (layout irrelevant for an elementwise loss).
    x_shape = (2, 4, 16, 16)
    y_pred = jax.random.normal(k1, x_shape, dtype=jnp.float32)
    y_true = jax.random.normal(k2, x_shape, dtype=jnp.float32)

    loss_mean = jax.block_until_ready(rmse_loss(y_pred, y_true, reduction="mean"))
    loss_sum = jax.block_until_ready(rmse_loss(y_pred, y_true, reduction="sum"))
    loss_none = jax.block_until_ready(rmse_loss(y_pred, y_true, reduction="none"))

    ref = jnp.sqrt((y_pred - y_true) ** 2 + _EPS)
    assert jnp.allclose(loss_none, ref, rtol=1e-5, atol=1e-6)
    assert jnp.allclose(loss_sum, ref.sum(), rtol=1e-5, atol=1e-3)
    assert jnp.allclose(loss_mean, ref.mean(), rtol=1e-5, atol=1e-6)

    # Exercise the padded/fallback path (element count not a multiple of 1024).
    odd_shape = (3, 5, 7)
    yp2 = jax.random.normal(k3, odd_shape, dtype=jnp.float32)
    yt2 = jax.random.normal(k4, odd_shape, dtype=jnp.float32)
    ref2 = jnp.sqrt((yp2 - yt2) ** 2 + _EPS)
    m2 = jax.block_until_ready(rmse_loss(yp2, yt2, reduction="mean"))
    n2 = jax.block_until_ready(rmse_loss(yp2, yt2, reduction="none"))
    assert jnp.allclose(n2, ref2, rtol=1e-5, atol=1e-6)
    assert jnp.allclose(m2, ref2.mean(), rtol=1e-5, atol=1e-6)

    print("KERNEL_OK")
</pallas_src>

<mosaic_0001>
module attributes {stable_mosaic.version = 11 : i64} {
  func.func @_rmse_reduce_kernel(%arg0: i32, %arg1: i32, %arg2: memref<8x256xf32, #tpu.memory_space<vmem>>, %arg3: memref<8x256xf32, #tpu.memory_space<vmem>>, %arg4: memref<1x256xf32, #tpu.memory_space<vmem>>, %arg5: memref<8x256xf32, #tpu.memory_space<vmem>>) attributes {dimension_semantics = [#tpu.dimension_semantics<parallel>, #tpu.dimension_semantics<arbitrary>], iteration_bounds = array<i64: 1, 1>, scalar_prefetch = 0 : i64, scratch_operands = 1 : i64, tpu.core_type = #tpu.core_type<tc>, window_params = [{transform_indices = @transform_0, window_bounds = array<i64: 8, 256>}, {transform_indices = @transform_1, window_bounds = array<i64: 8, 256>}, {transform_indices = @transform_2, window_bounds = array<i64: 1, 256>}]} {
    %c0_i32 = arith.constant 0 : i32
    %0 = arith.cmpi eq, %arg1, %c0_i32 : i32
    %1 = arith.extui %0 : i1 to i32
    %c0_i32_0 = arith.constant 0 : i32
    %2 = arith.cmpi ne, %1, %c0_i32_0 : i32
    scf.if %2 {
      %cst_11 = arith.constant 0.000000e+00 : f32
      %18 = vector.broadcast %cst_11 : f32 to vector<8x256xf32>
      %c0_12 = arith.constant 0 : index
      %c0_13 = arith.constant 0 : index
      %19 = vector.load %arg5[%c0_12, %c0_13] : memref<8x256xf32, #tpu.memory_space<vmem>>, vector<8x256xf32>
      tpu.vector_store %arg5[%c0_12, %c0_13], %18 {strides = array<i32>} : memref<8x256xf32, #tpu.memory_space<vmem>>, vector<8x256xf32>,
    } else {
    }
    %c0 = arith.constant 0 : index
    %c0_1 = arith.constant 0 : index
    %3 = vector.load %arg2[%c0, %c0_1] : memref<8x256xf32, #tpu.memory_space<vmem>>, vector<8x256xf32>
    %c0_2 = arith.constant 0 : index
    %c0_3 = arith.constant 0 : index
    %4 = vector.load %arg3[%c0_2, %c0_3] : memref<8x256xf32, #tpu.memory_space<vmem>>, vector<8x256xf32>
    %5 = arith.subf %3, %4 : vector<8x256xf32>
    %6 = arith.mulf %5, %5 : vector<8x256xf32>
    %cst = arith.constant 9.99999971E-10 : f32
    %7 = vector.broadcast %cst : f32 to vector<8x256xf32>
    %8 = arith.addf %6, %7 : vector<8x256xf32>
    %9 = math.sqrt %8 : vector<8x256xf32>
    %c0_4 = arith.constant 0 : index
    %c0_5 = arith.constant 0 : index
    %10 = vector.load %arg5[%c0_4, %c0_5] : memref<8x256xf32, #tpu.memory_space<vmem>>, vector<8x256xf32>
    %11 = vector.shape_cast %9 : vector<8x256xf32> to vector<1x8x256xf32>
    %cst_6 = arith.constant dense<0.000000e+00> : vector<8x256xf32>
    %12 = vector.multi_reduction <add>, %11, %cst_6 [0] : vector<1x8x256xf32> to vector<8x256xf32>
    %13 = arith.addf %10, %12 : vector<8x256xf32>
    %c0_7 = arith.constant 0 : index
    %c0_8 = arith.constant 0 : index
    %14 = vector.load %arg5[%c0_7, %c0_8] : memref<8x256xf32, #tpu.memory_space<vmem>>, vector<8x256xf32>
    tpu.vector_store %arg5[%c0_7, %c0_8], %13 {strides = array<i32>} : memref<8x256xf32, #tpu.memory_space<vmem>>, vector<8x256xf32>,
    %c0_i32_9 = arith.constant 0 : i32
    %15 = arith.cmpi eq, %arg1, %c0_i32_9 : i32
    %16 = arith.extui %15 : i1 to i32
    %c0_i32_10 = arith.constant 0 : i32
    %17 = arith.cmpi ne, %16, %c0_i32_10 : i32
    scf.if %17 {
      %c0_11 = arith.constant 0 : index
      %c0_12 = arith.constant 0 : index
      %18 = vector.load %arg5[%c0_11, %c0_12] : memref<8x256xf32, #tpu.memory_space<vmem>>, vector<8x256xf32>
      %cst_13 = arith.constant dense<0.000000e+00> : vector<256xf32>
      %19 = vector.multi_reduction <add>, %18, %cst_13 [0] : vector<8x256xf32> to vector<256xf32>
      %20 = vector.shape_cast %19 : vector<256xf32> to vector<1x256xf32>
      %c0_14 = arith.constant 0 : index
      %c0_15 = arith.constant 0 : index
      %21 = vector.load %arg4[%c0_14, %c0_15] : memref<1x256xf32, #tpu.memory_space<vmem>>, vector<1x256xf32>
      tpu.vector_store %arg4[%c0_14, %c0_15], %20 {strides = array<i32>} : memref<1x256xf32, #tpu.memory_space<vmem>>, vector<1x256xf32>,
    } else {
    }
    return
  }
  func.func @transform_0(%arg0: i32, %arg1: i32) -> (i32, i32) {
    %c1_i32 = arith.constant 1 : i32
    %0 = arith.muli %arg0, %c1_i32 : i32
    %1 = arith.addi %0, %arg1 : i32
    %c0_i32 = arith.constant 0 : i32
    %c0_i32_0 = arith.constant 0 : i32
    return %1, %c0_i32 : i32, i32
  }
  func.func @transform_1(%arg0: i32, %arg1: i32) -> (i32, i32) {
    %c1_i32 = arith.constant 1 : i32
    %0 = arith.muli %arg0, %c1_i32 : i32
    %1 = arith.addi %0, %arg1 : i32
    %c0_i32 = arith.constant 0 : i32
    %c0_i32_0 = arith.constant 0 : i32
    return %1, %c0_i32 : i32, i32
  }
  func.func @transform_2(%arg0: i32, %arg1: i32) -> (i32, i32) {
    %c0_i32 = arith.constant 0 : i32
    %c0_i32_0 = arith.constant 0 : i32
    return %arg0, %c0_i32 : i32, i32
  }
}

</mosaic_0001>

<llo_original>
// kernel: tpu_custom_call.1
$region0: #{tpu_custom_call.1}
  #allocation0 [shape = 'u32[]', space=smem, size = 0x4, offset = 0x4, fixed_abs, tag = 'smem constant byte address 0x4 - core index']
  #allocation1 [shape = 'u32[144,128]{1,0:T(1,128)}', space=vmem, size = 0x12000, scoped, tag = 'internal scratch']
  #allocation2 [shape = 'f32[8,256]{1,0:T(8,128)}', space=vmem, size = 0x2000, scoped, tag = 'scratch operand']
  %s0 = inlined_call_operand.hbm [shape: f32[8,256], index: 0, kind: input, shape index: {}]
  %s1 = inlined_call_operand.hbm [shape: f32[8,256], index: 1, kind: input, shape index: {}]
  %s2 = inlined_call_operand.hbm [shape: f32[1,256], index: 2, kind: output, shape index: {}]
  %s3 = sld [smem:[#allocation0]]
  $region34: #{tpu_custom_call.1} parent=0
    _
  %s5 = ssub.s32 1, %s3
  %s6 = scalar_select 0, %s5, %s3
  $region1: #{tpu_custom_call.1} parent=0
    #allocation3 [shape = 'u8[8192]{0}', space=vmem, size = 0x2000, scoped, tag = 'input window, operand 0, single buffered']
    #allocation4 [shape = 's32[1]{0}', space=sflag, size = 0x4, scoped, tag = 'scoped memory for tpu_custom_call.1']
    #allocation5 [shape = 's32[1]{0}', space=sflag, size = 0x4, scoped, tag = 'scoped memory for tpu_custom_call.1']
    #allocation6 [shape = 'u8[8192]{0}', space=vmem, size = 0x2000, scoped, tag = 'input window, operand 1, single buffered']
    #allocation7 [shape = 's32[1]{0}', space=sflag, size = 0x4, scoped, tag = 'scoped memory for tpu_custom_call.1']
    #allocation8 [shape = 'u8[1024]{0}', space=vmem, size = 0x400, scoped, tag = 'output window, operand 0, single buffered']
    %7 = vsyncpa [#allocation4], 0
    %8 = vsyncpa [#allocation7], 0
    %9 = vsyncpa [#allocation5], 0
    // Predicated region
    $region2: #{tpu_custom_call.1} parent=1 // pred_check
      _
    $region3: #{tpu_custom_call.1} parent=1 // pred_check_branch
      %11 = sbr.rel (0) target = $region5
    $region4: #{tpu_custom_call.1} parent=1 // pred_region
      %s12 = sadd.s32 0, 0
      %s14 = ssub.s32 256, 256
      %15 = vsyncadd [#allocation4], %s14
      %s16 = smul.addr %s12, 2
      %s17 = smul.addr %s16, 128
      %s18 = scalar_lea.hbm %s0, %s17
      %s20 = sshll.u32 [#allocation3], 4
      %s21 = int_to_ptr.vmem [resolvable:$true] %s20
      %23 = dma.hbm_to_vmem [thread:$0]  %s18, 256, %s21, [#allocation4]
    $region5: #{tpu_custom_call.1} parent=1 // pred_fallthru
      _
    // Predicated region
    $region6: #{tpu_custom_call.1} parent=1 // pred_check
      _
    $region7: #{tpu_custom_call.1} parent=1 // pred_check_branch
      %25 = sbr.rel (0) target = $region9
    $region8: #{tpu_custom_call.1} parent=1 // pred_region
      %s26 = sadd.s32 0, 0
      %s28 = ssub.s32 256, 256
      %29 = vsyncadd [#allocation7], %s28
      %s30 = smul.addr %s26, 2
      %s31 = smul.addr %s30, 128
      %s32 = scalar_lea.hbm %s1, %s31
      %s34 = sshll.u32 [#allocation6], 4
      %s35 = int_to_ptr.vmem [resolvable:$true] %s34
      %37 = dma.hbm_to_vmem [thread:$0]  %s32, 256, %s35, [#allocation7]
    $region9: #{tpu_custom_call.1} parent=1 // pred_fallthru
      _
    // Predicated region
    $region10: #{tpu_custom_call.1} parent=1 // pred_check
      _
    $region11: #{tpu_custom_call.1} parent=1 // pred_check_branch
      %39 = sbr.rel (0) target = $region13
    $region12: #{tpu_custom_call.1} parent=1 // pred_region
      %40 = dma.done [#allocation4], 256
    $region13: #{tpu_custom_call.1} parent=1 // pred_fallthru
      _
    // Predicated region
    $region14: #{tpu_custom_call.1} parent=1 // pred_check
      _
    $region15: #{tpu_custom_call.1} parent=1 // pred_check_branch
      %42 = sbr.rel (0) target = $region17
    $region16: #{tpu_custom_call.1} parent=1 // pred_region
      %43 = dma.done [#allocation7], 256
    $region17: #{tpu_custom_call.1} parent=1 // pred_fallthru
      _
    %s44 = sadd.s32 0, 0
    %s45 = sadd.s32 0, 0
    %p46 = scmp.eq.s32.totalorder 0, 0
    // Predicated region
    $region18: #{tpu_custom_call.1} parent=1 // pred_check
      %p47 = pneg %p46
    $region19: #{tpu_custom_call.1} parent=1 // pred_check_branch
      %49 = sbr.rel (%p47) target = $region21
    $region20: #{tpu_custom_call.1} parent=1 // pred_region
      %50 = vst [vmem:[#allocation2] sm:$0xff] 0.0
      %51 = vst [vmem:[#allocation2 + $0x8] sm:$0xff] 0.0
    $region21: #{tpu_custom_call.1} parent=1 // pred_fallthru
      _
    %v52 = vld [vmem:[#allocation3] sm:$0xff]
    %v53 = vld [vmem:[#allocation3 + $0x8] sm:$0xff]
    %v54 = vld [vmem:[#allocation6] sm:$0xff]
    %v55 = vld [vmem:[#allocation6 + $0x8] sm:$0xff]
    %v56 = vsub.f32 %v52, %v54
    %v57 = vsub.f32 %v53, %v55
    %v58 = vmul.f32 %v56, %v56
    %v59 = vmul.f32 %v57, %v57
    %v60 = vadd.f32 %v58, 1e-09
    %v61 = vadd.f32 %v59, 1e-09
    %v62 = vrsqrt.pop %v60
    %v63 = vmul.f32 %v60, %v62
    %vm64 = vcmp.eq.f32.partialorder %v60, inf
    %v65 = vsel %vm64, %v60, %v63
    %vm66 = vcmp.eq.f32.partialorder %v60, 0.0
    %v67 = vand.u32 %v60, 2147483648
    %v68 = vsel %vm66, %v67, %v65
    %v69 = vrsqrt.pop %v61
    %v70 = vmul.f32 %v61, %v69
    %vm71 = vcmp.eq.f32.partialorder %v61, inf
    %v72 = vsel %vm71, %v61, %v70
    %vm73 = vcmp.eq.f32.partialorder %v61, 0.0
    %v74 = vand.u32 %v61, 2147483648
    %v75 = vsel %vm73, %v74, %v72
    %v76 = vld [vmem:[#allocation2] sm:$0xff]
    %v77 = vld [vmem:[#allocation2 + $0x8] sm:$0xff]
    %v78 = vadd.f32 %v68, 0.0
    %v79 = vadd.f32 %v75, 0.0
    %v80 = vadd.f32 %v76, %v78
    %v81 = vadd.f32 %v77, %v79
    %82 = vst [vmem:[#allocation2] sm:$0xff] %v80
    %83 = vst [vmem:[#allocation2 + $0x8] sm:$0xff] %v81
    // Predicated region
    $region22: #{tpu_custom_call.1} parent=1 // pred_check
      %p84 = pneg %p46
    $region23: #{tpu_custom_call.1} parent=1 // pred_check_branch
      %86 = sbr.rel (%p84) target = $region25
    $region24: #{tpu_custom_call.1} parent=1 // pred_region
      %v87 = vld [vmem:[#allocation2] sm:$0xff]
      %v88 = vld [vmem:[#allocation2 + $0x8] sm:$0xff]
      %v89 = vrot.slane %v87, 4
      %v90 = vadd.f32 %v87, %v89
      %v91 = vrot.slane %v90, 2
      %v92 = vadd.f32 %v90, %v91
      %v93 = vrot.slane %v92, 1
      %v94 = vadd.f32 %v92, %v93
      %v95 = vrot.slane %v88, 4
      %v96 = vadd.f32 %v88, %v95
      %v97 = vrot.slane %v96, 2
      %v98 = vadd.f32 %v96, %v97
      %v99 = vrot.slane %v98, 1
      %v100 = vadd.f32 %v98, %v99
      %v103 = vcombine.low %v94, %v100
      %v105 = vunpack.c.l.s4 1966171168
      %v106 = vunpack.c.0.s8 %v105
      %v107 = vlaneseq
      %v108 = vshrl.u32 %v107, 7
      %v109 = vsub.s32 %v106, %v108
      %v110 = vrot.slane %v103, %v109
      %v112 = vunpack.c.l.s4 1966171168
      %v113 = vunpack.c.0.s8 %v112
      %v114 = vlaneseq
      %v115 = vshrl.u32 %v114, 7
      %v116 = vsub.s32 %v113, %v115
      %v117 = vrot.slane %v110, %v116
      %v119 = vlaneseq
      %vm120 = vcmp.ge.s32.totalorder %v119, 0
      %vm121 = vcmp.lt.s32.totalorder %v119, 256
      %vm122 = vmand %vm120, %vm121
      %123 = vst.msk [vmem:[#allocation8] sm:$0x3] %vm122, %v117
    $region25: #{tpu_custom_call.1} parent=1 // pred_fallthru
      _
    // Predicated region
    $region26: #{tpu_custom_call.1} parent=1 // pred_check
      _
    $region27: #{tpu_custom_call.1} parent=1 // pred_check_branch
      %125 = sbr.rel (0) target = $region29
    $region28: #{tpu_custom_call.1} parent=1 // pred_region
      %s127 = ssub.s32 32, 32
      %128 = vsyncadd [#allocation5], %s127
      %s130 = sshll.u32 [#allocation8], 4
      %s131 = int_to_ptr.vmem [resolvable:$true] %s130
      %133 = dma.vmem_to_hbm [thread:$0]  %s131, 32, %s2, [#allocation5]
    $region29: #{tpu_custom_call.1} parent=1 // pred_fallthru
      _
    // Predicated region
    $region30: #{tpu_custom_call.1} parent=1 // pred_check
      _
    $region31: #{tpu_custom_call.1} parent=1 // pred_check_branch
      %135 = sbr.rel (0) target = $region33
    $region32: #{tpu_custom_call.1} parent=1 // pred_region
      %136 = dma.done [#allocation5], 32
    $region33: #{tpu_custom_call.1} parent=1 // pred_fallthru
      _
    %137 = vsyncpa [#allocation4], 1
    %138 = vsyncpa [#allocation7], 1
    %139 = vsyncpa [#allocation5], 1

</llo_original>
